<compile_context>
chip_gen: v7x
topology: tpu7x:2x2x1
jax: 0.10.0
libtpu: 0.0.40
codegen_flags: <defaults>
</compile_context>

<pallas_src>
from functools import partial

import jax
import jax.numpy as jnp
from jax import lax
from jax.experimental import pallas as pl
from jax.experimental.pallas import tpu as pltpu

BN_EPS = 1e-5
POOL = 2


def down_kernel(xq_ref, b1_ref, t1_ref, b2_ref, t2_ref,
                y_ref, xfold_ref, hfold_ref, *, Nb, Hp, Wp, Cin, Cout):
    P = Hp + 2                    # padded rows per image in the stacked scratch
    M = Nb * P - 2                # stacked matmul M (valid rows + 2*(Nb-1) junk rows)
    Wp2 = Wp + 2

    # ---- MaxPool2d(2): elementwise max over the 4 pre-shuffled quadrant slabs (f32).
    q = xq_ref[...]                                             # (Nb, 4, Hp, Wp2*Cin)
    pooled = jnp.maximum(jnp.maximum(q[:, 0], q[:, 1]),
                         jnp.maximum(q[:, 2], q[:, 3]))         # (Nb, Hp, Wp2*Cin)

    # ---- stage pooled images into the row-padded scratch: full clear (halo rows end
    # up zero) + one full-width data store per image.  The W-halo lanes already arrive
    # as zeros from the wrapper layout, so no column stores are needed.
    xfold_ref[...] = jnp.zeros((Nb * P, Wp2 * Cin), jnp.float32)
    for n in range(Nb):
        xfold_ref[pl.ds(n * P + 1, Hp), :] = pooled[n]

    def conv3x3_bn_relu(src_ref, bmat_ref, t_ref):
        # 3 MXU matmuls (one per kernel row dy) over the whole Nb-image stack,
        # bf16 operands, f32 accumulate.  BN scale is pre-folded into bmat, so the
        # epilogue is a single add + ReLU (no per-element scale).
        acc = jnp.zeros((M, Wp * Cout), jnp.float32)
        for dy in range(3):
            a = src_ref[pl.ds(dy, M), :].astype(jnp.bfloat16)
            acc = acc + jnp.dot(a, bmat_ref[dy],
                                preferred_element_type=jnp.float32)
        return jnp.maximum(acc + t_ref[...], 0.0)               # (M, Wp*Cout), f32

    h = conv3x3_bn_relu(xfold_ref, b1_ref, t1_ref)

    # ---- stage h for the second conv: full clear (gives the zero row/lane halos),
    # one wide data store shifted down by one row, then re-zero the halo rows that the
    # shifted store filled with junk (full-width stores only).
    hfold_ref[...] = jnp.zeros((Nb * P, Wp2 * Cout), jnp.float32)
    hfold_ref[pl.ds(1, M), pl.ds(Cout, Wp * Cout)] = h
    if Nb > 1:
        z2 = jnp.zeros((2, Wp2 * Cout), jnp.float32)
        for n in range(Nb - 1):
            hfold_ref[pl.ds(n * P + Hp + 1, 2), :] = z2

    y = conv3x3_bn_relu(hfold_ref, b2_ref, t2_ref)              # (M, Wp*Cout)

    # ---- write out the valid rows of each image (junk boundary rows skipped).
    for n in range(Nb):
        y_ref[n] = y[n * P:n * P + Hp, :].astype(y_ref.dtype)


def down_forward(x_nchw, params, *, block_n=None):
    """Eval-mode `down` forward.  x: (N, Cin, H, W) -> (N, Cout, H//2, W//2)."""
    N, Cin, H, W = x_nchw.shape
    Cout = params["w1"].shape[-1]
    assert H % POOL == 0 and W % POOL == 0   # MaxPool2d(2), floor mode; even dims only
    Hp, Wp = H // POOL, W // POOL
    Wp2 = Wp + 2

    # Images per grid step (stacked along the matmul M axis).  The cap keeps the
    # per-step activation footprint tiny and, at large N, still leaves several grid
    # steps per TensorCore for the v7x megacore split.
    if block_n is None:
        block_n = next(d for d in (8, 4, 2, 1) if N % d == 0)
    Nb = block_n
    assert N % Nb == 0
    P = Hp + 2

    # NCHW -> NHWC, then pre-shuffle the four 2x2-pool quadrants into W-padded,
    # lane-folded slabs (Hp, Wp2*Cin).  Layout plumbing only (see TODO above).
    x = jnp.transpose(x_nchw, (0, 2, 3, 1))                               # (N,H,W,Cin)
    xq = x.reshape(N, Hp, 2, Wp, 2, Cin).transpose(0, 2, 4, 1, 3, 5)      # (N,2,2,Hp,Wp,Cin)
    xq = jnp.pad(xq, ((0, 0),) * 4 + ((1, 1), (0, 0)))                    # pad W -> Wp+2
    xq = xq.reshape(N, 4, Hp, Wp2 * Cin)

    # Eval-mode BN folded to per-channel scale/shift.  The scale goes into the packed
    # weights below; the shift (conv bias folded in) is tiled across Wp so it
    # broadcasts over the lane-folded (M, Wp*Cout) activations.
    def fold_bn(b, g, be, m, v):
        s = g / jnp.sqrt(v + BN_EPS)
        t = b * s + be - m * s
        return s, jnp.tile(t, Wp).reshape(1, Wp * Cout)

    s1, t1 = fold_bn(params["b1"], params["g1"], params["be1"], params["m1"], params["v1"])
    s2, t2 = fold_bn(params["b2"], params["g2"], params["be2"], params["m2"], params["v2"])

    # Block-Toeplitz weight packing (one matrix per kernel row dy) with the BN scale
    # folded into the output-channel columns, cast to bf16:
    #   B_dy[(w+dx)*Ci + c, w*Cout + o] = W[dy, dx, c, o] * s[o]
    def toeplitz(w_hwio, Ci):
        mats = []
        for dy in range(3):
            m = jnp.zeros((Wp2 * Ci, Wp * Cout), jnp.float32)
            for w in range(Wp):
                for dx in range(3):
                    m = m.at[(w + dx) * Ci:(w + dx + 1) * Ci,
                             w * Cout:(w + 1) * Cout].set(w_hwio[dy, dx])
            mats.append(m)
        return jnp.stack(mats).astype(jnp.bfloat16)          # (3, Wp2*Ci, Wp*Cout)

    b1m = toeplitz(params["w1"] * s1[None, None, None, :], Cin)
    b2m = toeplitz(params["w2"] * s2[None, None, None, :], Cout)

    kernel = partial(down_kernel, Nb=Nb, Hp=Hp, Wp=Wp, Cin=Cin, Cout=Cout)

    grid_spec = pltpu.PrefetchScalarGridSpec(
        num_scalar_prefetch=0,
        grid=(N // Nb,),
        in_specs=[
            pl.BlockSpec((Nb, 4, Hp, Wp2 * Cin), lambda g: (g, 0, 0, 0)),
            pl.BlockSpec((3, Wp2 * Cin, Wp * Cout), lambda g: (0, 0, 0)),
            pl.BlockSpec((1, Wp * Cout), lambda g: (0, 0)),
            pl.BlockSpec((3, Wp2 * Cout, Wp * Cout), lambda g: (0, 0, 0)),
            pl.BlockSpec((1, Wp * Cout), lambda g: (0, 0)),
        ],
        out_specs=pl.BlockSpec((Nb, Hp, Wp * Cout), lambda g: (g, 0, 0)),
        scratch_shapes=[
            pltpu.VMEM((Nb * P, Wp2 * Cin), jnp.float32),    # row-padded pooled input stack
            pltpu.VMEM((Nb * P, Wp2 * Cout), jnp.float32),   # row-padded hidden activation stack
        ],
    )

    y_folded = pl.pallas_call(
        kernel,
        grid_spec=grid_spec,
        out_shape=jax.ShapeDtypeStruct((N, Hp, Wp * Cout), x.dtype),
        compiler_params=pltpu.CompilerParams(dimension_semantics=("parallel",)),
    )(xq, b1m, t1, b2m, t2)

    # (N, Hp, Wp*Cout) lane-folded -> NCHW
    return y_folded.reshape(N, Hp, Wp, Cout).transpose(0, 3, 1, 2)
    # TODO(synk): training-mode BatchNorm (batch statistics + running-stat updates) is
    # not implemented; this kernel matches the module in eval() mode.


def reference_forward(x_nchw, params):
    """Pure-JAX f32 reference of the eval-mode `down` block."""
    x = jnp.transpose(x_nchw, (0, 2, 3, 1))
    x = lax.reduce_window(x, -jnp.inf, lax.max,
                          (1, POOL, POOL, 1), (1, POOL, POOL, 1), "VALID")

    def conv(z, w, b):
        return lax.conv_general_dilated(
            z, w, (1, 1), ((1, 1), (1, 1)),
            dimension_numbers=("NHWC", "HWIO", "NHWC"),
            precision=lax.Precision.HIGHEST) + b

    def bn(z, g, be, m, v):
        return (z - m) / jnp.sqrt(v + BN_EPS) * g + be

    h = jax.nn.relu(bn(conv(x, params["w1"], params["b1"]),
                       params["g1"], params["be1"], params["m1"], params["v1"]))
    y = jax.nn.relu(bn(conv(h, params["w2"], params["b2"]),
                       params["g2"], params["be2"], params["m2"], params["v2"]))
    return jnp.transpose(y, (0, 3, 1, 2))


if __name__ == "__main__":
    key = jax.random.PRNGKey(0)
    ks = jax.random.split(key, 13)
    N, Cin, Cout, H, W = 2, 4, 8, 16, 16

    x = jax.random.normal(ks[0], (N, Cin, H, W), jnp.float32)
    params = dict(
        # conv weights in HWIO (== torch (Cout,Cin,3,3) permuted to (3,3,Cin,Cout))
        w1=0.1 * jax.random.normal(ks[1], (3, 3, Cin, Cout), jnp.float32),
        b1=0.1 * jax.random.normal(ks[2], (Cout,), jnp.float32),
        g1=1.0 + 0.1 * jax.random.normal(ks[3], (Cout,), jnp.float32),
        be1=0.1 * jax.random.normal(ks[4], (Cout,), jnp.float32),
        m1=0.1 * jax.random.normal(ks[5], (Cout,), jnp.float32),
        v1=jax.random.uniform(ks[6], (Cout,), jnp.float32, 0.5, 1.5),
        w2=0.1 * jax.random.normal(ks[7], (3, 3, Cout, Cout), jnp.float32),
        b2=0.1 * jax.random.normal(ks[8], (Cout,), jnp.float32),
        g2=1.0 + 0.1 * jax.random.normal(ks[9], (Cout,), jnp.float32),
        be2=0.1 * jax.random.normal(ks[10], (Cout,), jnp.float32),
        m2=0.1 * jax.random.normal(ks[11], (Cout,), jnp.float32),
        v2=jax.random.uniform(ks[12], (Cout,), jnp.float32, 0.5, 1.5),
    )

    y = jax.jit(lambda xx: down_forward(xx, params))(x)
    jax.block_until_ready(y)

    y_exp = reference_forward(x, params)
    assert y.shape == (N, Cout, H // POOL, W // POOL)
    # bf16 MXU operands (f32 accumulate) -> small abs error vs. the f32 reference.
    max_err = float(jnp.max(jnp.abs(y - y_exp)))
    assert jnp.allclose(y, y_exp, atol=2e-2, rtol=2e-2), f"max_err={max_err}"
    print("KERNEL_OK")
</pallas_src>

<mosaic_0001>
module attributes {stable_mosaic.version = 11 : i64} {
  func.func @down_kernel(%arg0: i32, %arg1: memref<2x4x8x40xf32, #tpu.memory_space<vmem>>, %arg2: memref<3x40x64xbf16, #tpu.memory_space<vmem>>, %arg3: memref<1x64xf32, #tpu.memory_space<vmem>>, %arg4: memref<3x80x64xbf16, #tpu.memory_space<vmem>>, %arg5: memref<1x64xf32, #tpu.memory_space<vmem>>, %arg6: memref<2x8x64xf32, #tpu.memory_space<vmem>>, %arg7: memref<20x40xf32, #tpu.memory_space<vmem>>, %arg8: memref<20x80xf32, #tpu.memory_space<vmem>>) attributes {dimension_semantics = [#tpu.dimension_semantics<parallel>], iteration_bounds = array<i64: 1>, scalar_prefetch = 0 : i64, scratch_operands = 2 : i64, tpu.core_type = #tpu.core_type<tc>, window_params = [{transform_indices = @transform_0, window_bounds = array<i64: 2, 4, 8, 40>}, {pipeline_mode = #tpu.pipeline_mode<synchronous>, transform_indices = @transform_1, window_bounds = array<i64: 3, 40, 64>}, {pipeline_mode = #tpu.pipeline_mode<synchronous>, transform_indices = @transform_2, window_bounds = array<i64: 1, 64>}, {pipeline_mode = #tpu.pipeline_mode<synchronous>, transform_indices = @transform_3, window_bounds = array<i64: 3, 80, 64>}, {pipeline_mode = #tpu.pipeline_mode<synchronous>, transform_indices = @transform_4, window_bounds = array<i64: 1, 64>}, {transform_indices = @transform_5, window_bounds = array<i64: 2, 8, 64>}]} {
    %c0 = arith.constant 0 : index
    %c0_0 = arith.constant 0 : index
    %c0_1 = arith.constant 0 : index
    %c0_2 = arith.constant 0 : index
    %0 = vector.load %arg1[%c0, %c0_0, %c0_1, %c0_2] : memref<2x4x8x40xf32, #tpu.memory_space<vmem>>, vector<2x4x8x40xf32>
    %1 = vector.extract_strided_slice %0 {offsets = [0, 0, 0, 0], sizes = [2, 1, 8, 40], strides = [1, 1, 1, 1]} : vector<2x4x8x40xf32> to vector<2x1x8x40xf32>
    %2 = vector.shape_cast %1 : vector<2x1x8x40xf32> to vector<2x8x40xf32>
    %3 = vector.extract_strided_slice %0 {offsets = [0, 1, 0, 0], sizes = [2, 1, 8, 40], strides = [1, 1, 1, 1]} : vector<2x4x8x40xf32> to vector<2x1x8x40xf32>
    %4 = vector.shape_cast %3 : vector<2x1x8x40xf32> to vector<2x8x40xf32>
    %5 = arith.maximumf %2, %4 : vector<2x8x40xf32>
    %6 = vector.extract_strided_slice %0 {offsets = [0, 2, 0, 0], sizes = [2, 1, 8, 40], strides = [1, 1, 1, 1]} : vector<2x4x8x40xf32> to vector<2x1x8x40xf32>
    %7 = vector.shape_cast %6 : vector<2x1x8x40xf32> to vector<2x8x40xf32>
    %8 = vector.extract_strided_slice %0 {offsets = [0, 3, 0, 0], sizes = [2, 1, 8, 40], strides = [1, 1, 1, 1]} : vector<2x4x8x40xf32> to vector<2x1x8x40xf32>
    %9 = vector.shape_cast %8 : vector<2x1x8x40xf32> to vector<2x8x40xf32>
    %10 = arith.maximumf %7, %9 : vector<2x8x40xf32>
    %11 = arith.maximumf %5, %10 : vector<2x8x40xf32>
    %cst = arith.constant 0.000000e+00 : f32
    %12 = vector.broadcast %cst : f32 to vector<20x40xf32>
    %c0_3 = arith.constant 0 : index
    %c0_4 = arith.constant 0 : index
    %13 = vector.load %arg7[%c0_3, %c0_4] : memref<20x40xf32, #tpu.memory_space<vmem>>, vector<20x40xf32>
    tpu.vector_store %arg7[%c0_3, %c0_4], %12 {strides = array<i32>} : memref<20x40xf32, #tpu.memory_space<vmem>>, vector<20x40xf32>,
    %14 = vector.extract_strided_slice %11 {offsets = [0, 0, 0], sizes = [1, 8, 40], strides = [1, 1, 1]} : vector<2x8x40xf32> to vector<1x8x40xf32>
    %15 = vector.shape_cast %14 : vector<1x8x40xf32> to vector<8x40xf32>
    %c1 = arith.constant 1 : index
    %c0_5 = arith.constant 0 : index
    %16 = vector.load %arg7[%c1, %c0_5] : memref<20x40xf32, #tpu.memory_space<vmem>>, vector<8x40xf32>
    tpu.vector_store %arg7[%c1, %c0_5], %15 {strides = array<i32>} : memref<20x40xf32, #tpu.memory_space<vmem>>, vector<8x40xf32>,
    %17 = vector.extract_strided_slice %11 {offsets = [1, 0, 0], sizes = [1, 8, 40], strides = [1, 1, 1]} : vector<2x8x40xf32> to vector<1x8x40xf32>
    %18 = vector.shape_cast %17 : vector<1x8x40xf32> to vector<8x40xf32>
    %c11 = arith.constant 11 : index
    %c0_6 = arith.constant 0 : index
    %19 = vector.load %arg7[%c11, %c0_6] : memref<20x40xf32, #tpu.memory_space<vmem>>, vector<8x40xf32>
    tpu.vector_store %arg7[%c11, %c0_6], %18 {strides = array<i32>} : memref<20x40xf32, #tpu.memory_space<vmem>>, vector<8x40xf32>,
    %cst_7 = arith.constant 0.000000e+00 : f32
    %20 = vector.broadcast %cst_7 : f32 to vector<18x64xf32>
    %c0_8 = arith.constant 0 : index
    %c0_9 = arith.constant 0 : index
    %21 = vector.load %arg7[%c0_8, %c0_9] : memref<20x40xf32, #tpu.memory_space<vmem>>, vector<18x40xf32>
    %22 = arith.truncf %21 : vector<18x40xf32> to vector<18x40xbf16>
    %c0_10 = arith.constant 0 : index
    %c0_11 = arith.constant 0 : index
    %c0_12 = arith.constant 0 : index
    %23 = vector.load %arg2[%c0_10, %c0_11, %c0_12] : memref<3x40x64xbf16, #tpu.memory_space<vmem>>, vector<1x40x64xbf16>
    %24 = vector.shape_cast %23 : vector<1x40x64xbf16> to vector<40x64xbf16>
    %cst_13 = arith.constant dense<0.000000e+00> : vector<18x64xf32>
    %25 = tpu.matmul %22, %24, %cst_13 {dimension_numbers = #tpu.dot_dimension_numbers<[1], [0], [0], [1], [0, 0, 1, 1], [], []>} : vector<18x40xbf16>, vector<40x64xbf16>, vector<18x64xf32> -> vector<18x64xf32>
    %26 = arith.addf %20, %25 : vector<18x64xf32>
    %c1_14 = arith.constant 1 : index
    %c0_15 = arith.constant 0 : index
    %27 = vector.load %arg7[%c1_14, %c0_15] : memref<20x40xf32, #tpu.memory_space<vmem>>, vector<18x40xf32>
    %28 = arith.truncf %27 : vector<18x40xf32> to vector<18x40xbf16>
    %c1_16 = arith.constant 1 : index
    %c0_17 = arith.constant 0 : index
    %c0_18 = arith.constant 0 : index
    %29 = vector.load %arg2[%c1_16, %c0_17, %c0_18] : memref<3x40x64xbf16, #tpu.memory_space<vmem>>, vector<1x40x64xbf16>
    %30 = vector.shape_cast %29 : vector<1x40x64xbf16> to vector<40x64xbf16>
    %cst_19 = arith.constant dense<0.000000e+00> : vector<18x64xf32>
    %31 = tpu.matmul %28, %30, %cst_19 {dimension_numbers = #tpu.dot_dimension_numbers<[1], [0], [0], [1], [0, 0, 1, 1], [], []>} : vector<18x40xbf16>, vector<40x64xbf16>, vector<18x64xf32> -> vector<18x64xf32>
    %32 = arith.addf %26, %31 : vector<18x64xf32>
    %c2 = arith.constant 2 : index
    %c0_20 = arith.constant 0 : index
    %33 = vector.load %arg7[%c2, %c0_20] : memref<20x40xf32, #tpu.memory_space<vmem>>, vector<18x40xf32>
    %34 = arith.truncf %33 : vector<18x40xf32> to vector<18x40xbf16>
    %c2_21 = arith.constant 2 : index
    %c0_22 = arith.constant 0 : index
    %c0_23 = arith.constant 0 : index
    %35 = vector.load %arg2[%c2_21, %c0_22, %c0_23] : memref<3x40x64xbf16, #tpu.memory_space<vmem>>, vector<1x40x64xbf16>
    %36 = vector.shape_cast %35 : vector<1x40x64xbf16> to vector<40x64xbf16>
    %cst_24 = arith.constant dense<0.000000e+00> : vector<18x64xf32>
    %37 = tpu.matmul %34, %36, %cst_24 {dimension_numbers = #tpu.dot_dimension_numbers<[1], [0], [0], [1], [0, 0, 1, 1], [], []>} : vector<18x40xbf16>, vector<40x64xbf16>, vector<18x64xf32> -> vector<18x64xf32>
    %38 = arith.addf %32, %37 : vector<18x64xf32>
    %c0_25 = arith.constant 0 : index
    %c0_26 = arith.constant 0 : index
    %39 = vector.load %arg3[%c0_25, %c0_26] : memref<1x64xf32, #tpu.memory_space<vmem>>, vector<1x64xf32>
    %40 = vector.broadcast %39 : vector<1x64xf32> to vector<18x64xf32>
    %41 = arith.addf %38, %40 : vector<18x64xf32>
    %cst_27 = arith.constant 0.000000e+00 : f32
    %42 = vector.broadcast %cst_27 : f32 to vector<18x64xf32>
    %43 = arith.maximumf %41, %42 : vector<18x64xf32>
    %cst_28 = arith.constant 0.000000e+00 : f32
    %44 = vector.broadcast %cst_28 : f32 to vector<20x80xf32>
    %c0_29 = arith.constant 0 : index
    %c0_30 = arith.constant 0 : index
    %45 = vector.load %arg8[%c0_29, %c0_30] : memref<20x80xf32, #tpu.memory_space<vmem>>, vector<20x80xf32>
    tpu.vector_store %arg8[%c0_29, %c0_30], %44 {strides = array<i32>} : memref<20x80xf32, #tpu.memory_space<vmem>>, vector<20x80xf32>,
    %c1_31 = arith.constant 1 : index
    %c8 = arith.constant 8 : index
    %46 = vector.load %arg8[%c1_31, %c8] : memref<20x80xf32, #tpu.memory_space<vmem>>, vector<18x64xf32>
    tpu.vector_store %arg8[%c1_31, %c8], %43 {strides = array<i32>} : memref<20x80xf32, #tpu.memory_space<vmem>>, vector<18x64xf32>,
    %cst_32 = arith.constant 0.000000e+00 : f32
    %47 = vector.broadcast %cst_32 : f32 to vector<2x80xf32>
    %c9 = arith.constant 9 : index
    %c0_33 = arith.constant 0 : index
    %48 = vector.load %arg8[%c9, %c0_33] : memref<20x80xf32, #tpu.memory_space<vmem>>, vector<2x80xf32>
    tpu.vector_store %arg8[%c9, %c0_33], %47 {strides = array<i32>} : memref<20x80xf32, #tpu.memory_space<vmem>>, vector<2x80xf32>,
    %cst_34 = arith.constant 0.000000e+00 : f32
    %49 = vector.broadcast %cst_34 : f32 to vector<18x64xf32>
    %c0_35 = arith.constant 0 : index
    %c0_36 = arith.constant 0 : index
    %50 = vector.load %arg8[%c0_35, %c0_36] : memref<20x80xf32, #tpu.memory_space<vmem>>, vector<18x80xf32>
    %51 = arith.truncf %50 : vector<18x80xf32> to vector<18x80xbf16>
    %c0_37 = arith.constant 0 : index
    %c0_38 = arith.constant 0 : index
    %c0_39 = arith.constant 0 : index
    %52 = vector.load %arg4[%c0_37, %c0_38, %c0_39] : memref<3x80x64xbf16, #tpu.memory_space<vmem>>, vector<1x80x64xbf16>
    %53 = vector.shape_cast %52 : vector<1x80x64xbf16> to vector<80x64xbf16>
    %cst_40 = arith.constant dense<0.000000e+00> : vector<18x64xf32>
    %54 = tpu.matmul %51, %53, %cst_40 {dimension_numbers = #tpu.dot_dimension_numbers<[1], [0], [0], [1], [0, 0, 1, 1], [], []>} : vector<18x80xbf16>, vector<80x64xbf16>, vector<18x64xf32> -> vector<18x64xf32>
    %55 = arith.addf %49, %54 : vector<18x64xf32>
    %c1_41 = arith.constant 1 : index
    %c0_42 = arith.constant 0 : index
    %56 = vector.load %arg8[%c1_41, %c0_42] : memref<20x80xf32, #tpu.memory_space<vmem>>, vector<18x80xf32>
    %57 = arith.truncf %56 : vector<18x80xf32> to vector<18x80xbf16>
    %c1_43 = arith.constant 1 : index
    %c0_44 = arith.constant 0 : index
    %c0_45 = arith.constant 0 : index
    %58 = vector.load %arg4[%c1_43, %c0_44, %c0_45] : memref<3x80x64xbf16, #tpu.memory_space<vmem>>, vector<1x80x64xbf16>
    %59 = vector.shape_cast %58 : vector<1x80x64xbf16> to vector<80x64xbf16>
    %cst_46 = arith.constant dense<0.000000e+00> : vector<18x64xf32>
    %60 = tpu.matmul %57, %59, %cst_46 {dimension_numbers = #tpu.dot_dimension_numbers<[1], [0], [0], [1], [0, 0, 1, 1], [], []>} : vector<18x80xbf16>, vector<80x64xbf16>, vector<18x64xf32> -> vector<18x64xf32>
    %61 = arith.addf %55, %60 : vector<18x64xf32>
    %c2_47 = arith.constant 2 : index
    %c0_48 = arith.constant 0 : index
    %62 = vector.load %arg8[%c2_47, %c0_48] : memref<20x80xf32, #tpu.memory_space<vmem>>, vector<18x80xf32>
    %63 = arith.truncf %62 : vector<18x80xf32> to vector<18x80xbf16>
    %c2_49 = arith.constant 2 : index
    %c0_50 = arith.constant 0 : index
    %c0_51 = arith.constant 0 : index
    %64 = vector.load %arg4[%c2_49, %c0_50, %c0_51] : memref<3x80x64xbf16, #tpu.memory_space<vmem>>, vector<1x80x64xbf16>
    %65 = vector.shape_cast %64 : vector<1x80x64xbf16> to vector<80x64xbf16>
    %cst_52 = arith.constant dense<0.000000e+00> : vector<18x64xf32>
    %66 = tpu.matmul %63, %65, %cst_52 {dimension_numbers = #tpu.dot_dimension_numbers<[1], [0], [0], [1], [0, 0, 1, 1], [], []>} : vector<18x80xbf16>, vector<80x64xbf16>, vector<18x64xf32> -> vector<18x64xf32>
    %67 = arith.addf %61, %66 : vector<18x64xf32>
    %c0_53 = arith.constant 0 : index
    %c0_54 = arith.constant 0 : index
    %68 = vector.load %arg5[%c0_53, %c0_54] : memref<1x64xf32, #tpu.memory_space<vmem>>, vector<1x64xf32>
    %69 = vector.broadcast %68 : vector<1x64xf32> to vector<18x64xf32>
    %70 = arith.addf %67, %69 : vector<18x64xf32>
    %cst_55 = arith.constant 0.000000e+00 : f32
    %71 = vector.broadcast %cst_55 : f32 to vector<18x64xf32>
    %72 = arith.maximumf %70, %71 : vector<18x64xf32>
    %73 = vector.extract_strided_slice %72 {offsets = [0, 0], sizes = [8, 64], strides = [1, 1]} : vector<18x64xf32> to vector<8x64xf32>
    %c0_56 = arith.constant 0 : index
    %c0_57 = arith.constant 0 : index
    %c0_58 = arith.constant 0 : index
    %74 = vector.load %arg6[%c0_56, %c0_57, %c0_58] : memref<2x8x64xf32, #tpu.memory_space<vmem>>, vector<1x8x64xf32>
    %75 = vector.shape_cast %74 : vector<1x8x64xf32> to vector<8x64xf32>
    %76 = vector.shape_cast %73 : vector<8x64xf32> to vector<1x8x64xf32>
    tpu.vector_store %arg6[%c0_56, %c0_57, %c0_58], %76 {strides = array<i32>} : memref<2x8x64xf32, #tpu.memory_space<vmem>>, vector<1x8x64xf32>,
    %77 = vector.extract_strided_slice %72 {offsets = [10, 0], sizes = [8, 64], strides = [1, 1]} : vector<18x64xf32> to vector<8x64xf32>
    %c1_59 = arith.constant 1 : index
    %c0_60 = arith.constant 0 : index
    %c0_61 = arith.constant 0 : index
    %78 = vector.load %arg6[%c1_59, %c0_60, %c0_61] : memref<2x8x64xf32, #tpu.memory_space<vmem>>, vector<1x8x64xf32>
    %79 = vector.shape_cast %78 : vector<1x8x64xf32> to vector<8x64xf32>
    %80 = vector.shape_cast %77 : vector<8x64xf32> to vector<1x8x64xf32>
    tpu.vector_store %arg6[%c1_59, %c0_60, %c0_61], %80 {strides = array<i32>} : memref<2x8x64xf32, #tpu.memory_space<vmem>>, vector<1x8x64xf32>,
    return
  }
  func.func @transform_0(%arg0: i32) -> (i32, i32, i32, i32) {
    %c0_i32 = arith.constant 0 : i32
    %c0_i32_0 = arith.constant 0 : i32
    %c0_i32_1 = arith.constant 0 : i32
    %c0_i32_2 = arith.constant 0 : i32
    return %arg0, %c0_i32, %c0_i32_0, %c0_i32_1 : i32, i32, i32, i32
  }
  func.func @transform_1(%arg0: i32) -> (i32, i32, i32) {
    %c0_i32 = arith.constant 0 : i32
    %c0_i32_0 = arith.constant 0 : i32
    %c0_i32_1 = arith.constant 0 : i32
    %c0_i32_2 = arith.constant 0 : i32
    return %c0_i32, %c0_i32_0, %c0_i32_1 : i32, i32, i32
  }
  func.func @transform_2(%arg0: i32) -> (i32, i32) {
    %c0_i32 = arith.constant 0 : i32
    %c0_i32_0 = arith.constant 0 : i32
    %c0_i32_1 = arith.constant 0 : i32
    return %c0_i32, %c0_i32_0 : i32, i32
  }
  func.func @transform_3(%arg0: i32) -> (i32, i32, i32) {
    %c0_i32 = arith.constant 0 : i32
    %c0_i32_0 = arith.constant 0 : i32
    %c0_i32_1 = arith.constant 0 : i32
    %c0_i32_2 = arith.constant 0 : i32
    return %c0_i32, %c0_i32_0, %c0_i32_1 : i32, i32, i32
  }
  func.func @transform_4(%arg0: i32) -> (i32, i32) {
    %c0_i32 = arith.constant 0 : i32
    %c0_i32_0 = arith.constant 0 : i32
    %c0_i32_1 = arith.constant 0 : i32
    return %c0_i32, %c0_i32_0 : i32, i32
  }
  func.func @transform_5(%arg0: i32) -> (i32, i32, i32) {
    %c0_i32 = arith.constant 0 : i32
    %c0_i32_0 = arith.constant 0 : i32
    %c0_i32_1 = arith.constant 0 : i32
    return %arg0, %c0_i32, %c0_i32_0 : i32, i32, i32
  }
}

</mosaic_0001>

<llo_original>
// kernel: tile.10
$region0: #{tile.10}
  #allocation0 [shape = 's32[1]{0}', space=sflag, size = 0x4, scoped, tag = 'scoped memory for tile.10']
  %s0 = inlined_call_operand.vmem [shape: f32[8], index: 0, kind: input, shape index: {}]
  %s1 = inlined_call_operand.vmem [shape: f32[8,8], index: 1, kind: output, shape index: {}]
  // Predicated region
  $region2: #{tile.10} parent=0 // pred_check
    _
  $region3: #{tile.10} parent=0 // pred_check_branch
    %3 = sbr.rel (0) target = $region5
  $region4: #{tile.10} parent=0 // pred_region
    _
  $region5: #{tile.10} parent=0 // pred_fallthru
    _
  %v4 = vld [vmem:[%s0] ss:$0 sm:$0xff]
  %5 = vst [vmem:[%s1] sm:$0xff] %v4

// kernel: tile.11
$region0: #{tile.11}
  %s0 = inlined_call_operand.vmem [shape: f32[8,8], index: 0, kind: input, shape index: {}]
  %s1 = inlined_call_operand.vmem [shape: f32[1,64], index: 1, kind: output, shape index: {}]
  $region1: #{tile.11} parent=0
    #allocation0 [shape = 'u8[4096]{0}', space=vmem, size = 0x1000, scoped, tag = 'scoped mem for output reshape']
    %v2 = vld [vmem:[%s0] sm:$0x1]
    %vm3 = vcmask 64512
    %4 = vst.msk [vmem:[#allocation0] sm:$0x1] %vm3, %v2
    %s5 = scalar_lea.vmem %s0, 7
    %v6 = vld [vmem:[%s5] sm:$0x1]
    %7 = vrot.lane.b32.xlu0 %v6, 56
    %v8 = vpop.permute.xlu0 %7
    %vm9 = vcmask 523712
    %10 = vst.msk [vmem:[#allocation0] sm:$0x1] %vm9, %v8
    %s11 = scalar_lea.vmem %s0, 6
    %v12 = vld [vmem:[%s11] sm:$0x1]
    %13 = vrot.lane.b32.xlu0 %v12, 48
    %v14 = vpop.permute.xlu0 %13
    %vm15 = vcmask 458112
    %16 = vst.msk [vmem:[#allocation0] sm:$0x1] %vm15, %v14
    %s17 = scalar_lea.vmem %s0, 5
    %v18 = vld [vmem:[%s17] sm:$0x1]
    %19 = vrot.lane.b32.xlu0 %v18, 40
    %v20 = vpop.permute.xlu0 %19
    %vm21 = vcmask 392512
    %22 = vst.msk [vmem:[#allocation0] sm:$0x1] %vm21, %v20
    %s23 = scalar_lea.vmem %s0, 4
    %v24 = vld [vmem:[%s23] sm:$0x1]
    %25 = vrot.lane.b32.xlu0 %v24, 32
    %v26 = vpop.permute.xlu0 %25
    %vm27 = vcmask 326912
    %28 = vst.msk [vmem:[#allocation0] sm:$0x1] %vm27, %v26
    %s29 = scalar_lea.vmem %s0, 3
    %v30 = vld [vmem:[%s29] sm:$0x1]
    %31 = vrot.lane.b32.xlu0 %v30, 24
    %v32 = vpop.permute.xlu0 %31
    %vm33 = vcmask 261312
    %34 = vst.msk [vmem:[#allocation0] sm:$0x1] %vm33, %v32
    %s35 = scalar_lea.vmem %s0, 2
    %v36 = vld [vmem:[%s35] sm:$0x1]
    %37 = vrot.lane.b32.xlu0 %v36, 16
    %v38 = vpop.permute.xlu0 %37
    %vm39 = vcmask 195712
    %40 = vst.msk [vmem:[#allocation0] sm:$0x1] %vm39, %v38
    %s41 = scalar_lea.vmem %s0, 1
    %v42 = vld [vmem:[%s41] sm:$0x1]
    %43 = vrot.lane.b32.xlu0 %v42, 8
    %v44 = vpop.permute.xlu0 %43
    %vm45 = vcmask 130112
    %46 = vst.msk [vmem:[#allocation0] sm:$0x1] %vm45, %v44
    %s48 = sshllo.u32 0, 1
    %v50 = vld [vmem:[#allocation0] sm:%s48]
    %s51 = sshllo.u32 0, 1
    %52 = vst [vmem:[%s1] sm:%s51] %v50

// kernel: _lambda_.1
$region0: #{_lambda_.1}
  #allocation0 [shape = 'u32[]', space=smem, size = 0x4, offset = 0x4, fixed_abs, tag = 'smem constant byte address 0x4 - core index']
  #allocation1 [shape = 'u32[144,128]{1,0:T(1,128)}', space=vmem, size = 0x12000, scoped, tag = 'internal scratch']
  #allocation2 [shape = 'f32[20,40]{1,0:T(8,128)}', space=vmem, size = 0x3000, scoped, tag = 'scratch operand']
  #allocation3 [shape = 'f32[20,80]{1,0:T(8,128)}', space=vmem, size = 0x3000, scoped, tag = 'scratch operand']
  %s0 = inlined_call_operand.vmem [shape: f32[2,4,8,40], index: 0, kind: input, shape index: {}]
  %s1 = inlined_call_operand.vmem [shape: bf16[3,40,64], index: 1, kind: input, shape index: {}]
  %s2 = inlined_call_operand.vmem [shape: f32[1,64], index: 2, kind: input, shape index: {}]
  %s3 = inlined_call_operand.vmem [shape: bf16[3,80,64], index: 3, kind: input, shape index: {}]
  %s4 = inlined_call_operand.vmem [shape: f32[1,64], index: 4, kind: input, shape index: {}]
  %s5 = inlined_call_operand.vmem [shape: f32[2,8,64], index: 5, kind: output, shape index: {}]
  %s6 = sld [smem:[#allocation0]]
  $region30: #{_lambda_.1} parent=0
    _
  %s8 = ssub.s32 1, %s6
  %s9 = scalar_select 0, %s8, %s6
  // Predicated region
  $region2: #{_lambda_.1} parent=0 // pred_check
    _
  $region3: #{_lambda_.1} parent=0 // pred_check_branch
    %11 = sbr.rel (0) target = $region5
  $region4: #{_lambda_.1} parent=0 // pred_region
    _
  $region5: #{_lambda_.1} parent=0 // pred_fallthru
    _
  // Predicated region
  $region6: #{_lambda_.1} parent=0 // pred_check
    _
  $region7: #{_lambda_.1} parent=0 // pred_check_branch
    %13 = sbr.rel (0) target = $region9
  $region8: #{_lambda_.1} parent=0 // pred_region
    _
  $region9: #{_lambda_.1} parent=0 // pred_fallthru
    _
  // Predicated region
  $region10: #{_lambda_.1} parent=0 // pred_check
    _
  $region11: #{_lambda_.1} parent=0 // pred_check_branch
    %15 = sbr.rel (0) target = $region13
  $region12: #{_lambda_.1} parent=0 // pred_region
    _
  $region13: #{_lambda_.1} parent=0 // pred_fallthru
    _
  // Predicated region
  $region14: #{_lambda_.1} parent=0 // pred_check
    _
  $region15: #{_lambda_.1} parent=0 // pred_check_branch
    %17 = sbr.rel (0) target = $region17
  $region16: #{_lambda_.1} parent=0 // pred_region
    _
  $region17: #{_lambda_.1} parent=0 // pred_fallthru
    _
  // Predicated region
  $region18: #{_lambda_.1} parent=0 // pred_check
    _
  $region19: #{_lambda_.1} parent=0 // pred_check_branch
    %19 = sbr.rel (0) target = $region21
  $region20: #{_lambda_.1} parent=0 // pred_region
    _
  $region21: #{_lambda_.1} parent=0 // pred_fallthru
    _
  %v21 = vld [vmem:[%s0] sm:$0xff]
  %v22 = vld [vmem:[%s0 + $0x8] sm:$0xff]
  %v23 = vld [vmem:[%s0 + $0x10] sm:$0xff]
  %v24 = vld [vmem:[%s0 + $0x18] sm:$0xff]
  %v25 = vld [vmem:[%s0 + $0x20] sm:$0xff]
  %v26 = vld [vmem:[%s0 + $0x28] sm:$0xff]
  %v27 = vld [vmem:[%s0 + $0x30] sm:$0xff]
  %v28 = vld [vmem:[%s0 + $0x38] sm:$0xff]
  %v29 = vmax.f32 %v21, %v22
  %v30 = vmax.f32 %v25, %v26
  %v31 = vmax.f32 %v23, %v24
  %v32 = vmax.f32 %v27, %v28
  %v33 = vmax.f32 %v29, %v31
  %v34 = vmax.f32 %v30, %v32
  %vm35 = vcmask 326656
  %36 = vst.msk [vmem:[#allocation2] sm:$0xff] %vm35, 0.0
  %37 = vst.msk [vmem:[#allocation2 + $0x8] sm:$0xff] %vm35, 0.0
  %vm38 = vcmask 322560
  %39 = vst.msk [vmem:[#allocation2 + $0x10] sm:$0xf] %vm38, 0.0
  %40 = vst.msk [vmem:[#allocation2 + $0x1] sm:$0xff] %vm35, %v33
  %41 = vst.msk [vmem:[#allocation2 + $0xb] sm:$0xff] %vm35, %v34
  %v42 = vld [vmem:[#allocation2] sm:$0xff]
  %v43 = vld [vmem:[#allocation2 + $0x8] sm:$0xff]
  %v44 = vld [vmem:[#allocation2 + $0x10] sm:$0x3]
  %v45 = vpack.c.bf16 %v43, %v42
  %v46 = vpack.c.bf16 %v44, %v44
  %v47 = vld [vmem:[%s1] sm:$0xf]
  %v48 = vld [vmem:[%s1 + $0x4] sm:$0xf]
  %v49 = vld [vmem:[%s1 + $0x8] sm:$0xf]
  %v50 = vld [vmem:[%s1 + $0xc] sm:$0xf]
  %v51 = vld [vmem:[%s1 + $0x10] sm:$0xf]
  %v52 = vld [vmem:[#allocation2 + $0x1] sm:$0xff]
  %v53 = vld [vmem:[#allocation2 + $0x9] sm:$0xff]
  %v54 = vld [vmem:[#allocation2 + $0x11] sm:$0x3]
  %v55 = vpack.c.bf16 %v53, %v52
  %v56 = vpack.c.bf16 %v54, %v54
  %s57 = scalar_lea.vmem %s1, 20
  %v58 = vld [vmem:[%s57] sm:$0xf]
  %v59 = vld [vmem:[%s57 + $0x4] sm:$0xf]
  %v60 = vld [vmem:[%s57 + $0x8] sm:$0xf]
  %v61 = vld [vmem:[%s57 + $0xc] sm:$0xf]
  %v62 = vld [vmem:[%s57 + $0x10] sm:$0xf]
  %v68 = vunpack.c.l.b16 %v58
  %v69 = vunpack.c.l.b16 %v59
  %v70 = vunpack.c.l.b16 %v60
  %v71 = vunpack.c.l.b16 %v61
  %v72 = vunpack.c.l.b16 %v62
  %v73 = vpack.c.b16 %v69, %v68
  %v74 = vpack.c.b16 %v71, %v70
  %v75 = vpack.c.b16 %v72, %v72
  %v79 = vsel %vm35, %v55, 0
  %v82 = vsel %vm35, %v56, 0
  %vm84 = vcmask 1043456
  %v86 = vsel %vm84, %v75, 0
  %88 = vmatprep.subr.bf16.mxu0 0
  %89 = vmatpush1.bf16.msra.mxu0 %v73
  %90 = vmatprep.subr.bf16.mxu0 0
  %91 = vmatpush1.bf16.msra.mxu0 %v74
  %92 = vmatprep.subr.bf16.mxu0 0
  %93 = vmatpush1.bf16.msra.mxu0 %v86
  %94 = vmatprep.subr.bf16.mxu0 0
  %95 = vmatpush1.bf16.msra.mxu0 0
  %96 = vmatprep.subr.bf16.mxu0 0
  %97 = vmatpush1.bf16.msra.mxu0 0
  %98 = vmatprep.subr.bf16.mxu0 0
  %99 = vmatpush1.bf16.msra.mxu0 0
  %100 = vmatprep.subr.bf16.mxu0 0
  %101 = vmatpush1.bf16.msra.mxu0 0
  %102 = vmatprep.subr.bf16.mxu0 0
  %103 = vmatpush1.bf16.msra.mxu0 0
  %104 = vmatprep.subr.bf16.mxu0 0
  %105 = vmatpush1.bf16.msra.mxu0 0
  %106 = vmatprep.subr.bf16.mxu0 0
  %107 = vmatpush1.bf16.msra.mxu0 0
  %108 = vmatprep.subr.bf16.mxu0 0
  %109 = vmatpush1.bf16.msra.mxu0 0
  %110 = vmatprep.subr.bf16.mxu0 0
  %111 = vmatpush1.bf16.msra.mxu0 0
  %112 = vmatprep.subr.bf16.mxu0 0
  %113 = vmatpush1.bf16.msra.mxu0 0
  %114 = vmatprep.subr.bf16.mxu0 0
  %115 = vmatpush1.bf16.msra.mxu0 0
  %116 = vmatprep.subr.bf16.mxu0 0
  %117 = vmatpush1.bf16.msra.mxu0 0
  %118 = vmatprep.subr.bf16.mxu0 0
  %119 = vmatpush1.bf16.msra.mxu0 0
  %120 = vmatprep.mubr.bf16.mxu0 0
  %121 = vmatmul.mubr.bf16.gmra.mrb[0].mxu0 %v79
  %v122 = vpop.f32.mrb[0].mxu0
  %v123 = vadd.f32 0.0, %v122
  %v124 = vpop.f32.mrb[0].mxu0
  %v125 = vpop.f32.mrb[0].mxu0
  %v126 = vadd.f32 0.0, %v125
  %v127 = vpop.f32.mrb[0].mxu0
  %128 = vmatprep.mubr.bf16.mxu0 0
  %129 = vmatmul.mubr.bf16.gmra.mrb[0].mxu0 %v82
  %v130 = vpop.f32.mrb[0].mxu0
  %v131 = vadd.f32 0.0, %v130
  %v132 = vpop.f32.mrb[0].mxu0
  %v133 = vpop.f32.mrb[0].mxu0
  %v134 = vpop.f32.mrb[0].mxu0
  %135 = vdwg.mxu0
  %v141 = vunpack.c.l.b16 %v47
  %v142 = vunpack.c.l.b16 %v48
  %v143 = vunpack.c.l.b16 %v49
  %v144 = vunpack.c.l.b16 %v50
  %v145 = vunpack.c.l.b16 %v51
  %v146 = vpack.c.b16 %v142, %v141
  %v147 = vpack.c.b16 %v144, %v143
  %v148 = vpack.c.b16 %v145, %v145
  %v152 = vsel %vm35, %v45, 0
  %v155 = vsel %vm35, %v46, 0
  %v158 = vsel %vm84, %v148, 0
  %160 = vmatprep.subr.bf16.mxu0 0
  %161 = vmatpush1.bf16.msra.mxu0 %v146
  %162 = vmatprep.subr.bf16.mxu0 0
  %163 = vmatpush1.bf16.msra.mxu0 %v147
  %164 = vmatprep.subr.bf16.mxu0 0
  %165 = vmatpush1.bf16.msra.mxu0 %v158
  %166 = vmatprep.subr.bf16.mxu0 0
  %167 = vmatpush1.bf16.msra.mxu0 0
  %168 = vmatprep.subr.bf16.mxu0 0
  %169 = vmatpush1.bf16.msra.mxu0 0
  %170 = vmatprep.subr.bf16.mxu0 0
  %171 = vmatpush1.bf16.msra.mxu0 0
  %172 = vmatprep.subr.bf16.mxu0 0
  %173 = vmatpush1.bf16.msra.mxu0 0
  %174 = vmatprep.subr.bf16.mxu0 0
  %175 = vmatpush1.bf16.msra.mxu0 0
  %176 = vmatprep.subr.bf16.mxu0 0
  %177 = vmatpush1.bf16.msra.mxu0 0
  %178 = vmatprep.subr.bf16.mxu0 0
  %179 = vmatpush1.bf16.msra.mxu0 0
  %180 = vmatprep.subr.bf16.mxu0 0
  %181 = vmatpush1.bf16.msra.mxu0 0
  %182 = vmatprep.subr.bf16.mxu0 0
  %183 = vmatpush1.bf16.msra.mxu0 0
  %184 = vmatprep.subr.bf16.mxu0 0
  %185 = vmatpush1.bf16.msra.mxu0 0
  %186 = vmatprep.subr.bf16.mxu0 0
  %187 = vmatpush1.bf16.msra.mxu0 0
  %188 = vmatprep.subr.bf16.mxu0 0
  %189 = vmatpush1.bf16.msra.mxu0 0
  %190 = vmatprep.subr.bf16.mxu0 0
  %191 = vmatpush1.bf16.msra.mxu0 0
  %192 = vmatprep.mubr.bf16.mxu0 0
  %193 = vmatmul.mubr.bf16.gmra.mrb[0].mxu0 %v152
  %v194 = vpop.f32.mrb[0].mxu0
  %v195 = vadd.f32 %v123, %v194
  %v196 = vpop.f32.mrb[0].mxu0
  %v197 = vpop.f32.mrb[0].mxu0
  %v198 = vadd.f32 %v126, %v197
  %v199 = vpop.f32.mrb[0].mxu0
  %200 = vmatprep.mubr.bf16.mxu0 0
  %201 = vmatmul.mubr.bf16.gmra.mrb[0].mxu0 %v155
  %v202 = vpop.f32.mrb[0].mxu0
  %v203 = vadd.f32 %v131, %v202
  %v204 = vpop.f32.mrb[0].mxu0
  %v205 = vpop.f32.mrb[0].mxu0
  %v206 = vpop.f32.mrb[0].mxu0
  %207 = vdwg.mxu0
  %v208 = vld [vmem:[#allocation2 + $0x2] sm:$0xff]
  %v209 = vld [vmem:[#allocation2 + $0xa] sm:$0xff]
  %v210 = vld [vmem:[#allocation2 + $0x12] sm:$0x3]
  %v211 = vpack.c.bf16 %v209, %v208
  %v212 = vpack.c.bf16 %v210, %v210
  %s213 = scalar_lea.vmem %s1, 40
  %v214 = vld [vmem:[%s213] sm:$0xf]
  %v215 = vld [vmem:[%s213 + $0x4] sm:$0xf]
  %v216 = vld [vmem:[%s213 + $0x8] sm:$0xf]
  %v217 = vld [vmem:[%s213 + $0xc] sm:$0xf]
  %v218 = vld [vmem:[%s213 + $0x10] sm:$0xf]
  %v224 = vunpack.c.l.b16 %v214
  %v225 = vunpack.c.l.b16 %v215
  %v226 = vunpack.c.l.b16 %v216
  %v227 = vunpack.c.l.b16 %v217
  %v228 = vunpack.c.l.b16 %v218
  %v229 = vpack.c.b16 %v225, %v224
  %v230 = vpack.c.b16 %v227, %v226
  %v231 = vpack.c.b16 %v228, %v228
  %v235 = vsel %vm35, %v211, 0
  %v238 = vsel %vm35, %v212, 0
  %v241 = vsel %vm84, %v231, 0
  %243 = vmatprep.subr.bf16.mxu0 0
  %244 = vmatpush1.bf16.msra.mxu0 %v229
  %245 = vmatprep.subr.bf16.mxu0 0
  %246 = vmatpush1.bf16.msra.mxu0 %v230
  %247 = vmatprep.subr.bf16.mxu0 0
  %248 = vmatpush1.bf16.msra.mxu0 %v241
  %249 = vmatprep.subr.bf16.mxu0 0
  %250 = vmatpush1.bf16.msra.mxu0 0
  %251 = vmatprep.subr.bf16.mxu0 0
  %252 = vmatpush1.bf16.msra.mxu0 0
  %253 = vmatprep.subr.bf16.mxu0 0
  %254 = vmatpush1.bf16.msra.mxu0 0
  %255 = vmatprep.subr.bf16.mxu0 0
  %256 = vmatpush1.bf16.msra.mxu0 0
  %257 = vmatprep.subr.bf16.mxu0 0
  %258 = vmatpush1.bf16.msra.mxu0 0
  %259 = vmatprep.subr.bf16.mxu0 0
  %260 = vmatpush1.bf16.msra.mxu0 0
  %261 = vmatprep.subr.bf16.mxu0 0
  %262 = vmatpush1.bf16.msra.mxu0 0
  %263 = vmatprep.subr.bf16.mxu0 0
  %264 = vmatpush1.bf16.msra.mxu0 0
  %265 = vmatprep.subr.bf16.mxu0 0
  %266 = vmatpush1.bf16.msra.mxu0 0
  %267 = vmatprep.subr.bf16.mxu0 0
  %268 = vmatpush1.bf16.msra.mxu0 0
  %269 = vmatprep.subr.bf16.mxu0 0
  %270 = vmatpush1.bf16.msra.mxu0 0
  %271 = vmatprep.subr.bf16.mxu0 0
  %272 = vmatpush1.bf16.msra.mxu0 0
  %273 = vmatprep.subr.bf16.mxu0 0
  %274 = vmatpush1.bf16.msra.mxu0 0
  %275 = vmatprep.mubr.bf16.mxu0 0
  %276 = vmatmul.mubr.bf16.gmra.mrb[0].mxu0 %v235
  %v277 = vpop.f32.mrb[0].mxu0
  %v278 = vadd.f32 0.0, %v277
  %v279 = vpop.f32.mrb[0].mxu0
  %v280 = vpop.f32.mrb[0].mxu0
  %v281 = vadd.f32 0.0, %v280
  %v282 = vpop.f32.mrb[0].mxu0
  %283 = vmatprep.mubr.bf16.mxu0 0
  %284 = vmatmul.mubr.bf16.gmra.mrb[0].mxu0 %v238
  %v285 = vpop.f32.mrb[0].mxu0
  %v286 = vadd.f32 0.0, %v285
  %v287 = vpop.f32.mrb[0].mxu0
  %v288 = vpop.f32.mrb[0].mxu0
  %v289 = vpop.f32.mrb[0].mxu0
  %290 = vdwg.mxu0
  %v291 = vadd.f32 %v195, %v278
  %v292 = vadd.f32 %v198, %v281
  %v293 = vadd.f32 %v203, %v286
  %v294 = vld [vmem:[%s2] sm:$0x1]
  %v296 = vlaneseq
  %v297 = vshrl.u32 %v296, 7
  %v298 = vsub.s32 0, %v297
  %v299 = vrot.slane %v294, %v298
  %v301 = vadd.f32 %v291, %v299
  %v302 = vadd.f32 %v292, %v299
  %v303 = vadd.f32 %v293, %v299
  %v304 = vmax.f32 %v301, 0.0
  %v305 = vmax.f32 %v302, 0.0
  %v306 = vmax.f32 %v303, 0.0
  %vm307 = vcmask 654336
  %308 = vst.msk [vmem:[#allocation3] sm:$0xff] %vm307, 0.0
  %309 = vst.msk [vmem:[#allocation3 + $0x8] sm:$0xff] %vm307, 0.0
  %vm310 = vcmask 650240
  %311 = vst.msk [vmem:[#allocation3 + $0x10] sm:$0xf] %vm310, 0.0
  %315 = vrot.lane.b32.xlu0 %v304, 8
  %v316 = vpop.permute.xlu0 %315
  %317 = vrot.lane.b32.xlu0 %v305, 8
  %v318 = vpop.permute.xlu0 %317
  %319 = vrot.lane.b32.xlu0 %v306, 8
  %v320 = vpop.permute.xlu0 %319
  %vm324 = vcmask 588864
  %325 = vst.msk [vmem:[#allocation3 + $0x1] sm:$0xff] %vm324, %v316
  %326 = vst.msk [vmem:[#allocation3 + $0x9] sm:$0xff] %vm324, %v318
  %vm327 = vcmask 582720
  %328 = vst.msk [vmem:[#allocation3 + $0x11] sm:$0x3] %vm327, %v320
  %vm329 = vcmask 648192
  %330 = vst.msk [vmem:[#allocation3 + $0x9] sm:$0x3] %vm329, 0.0
  %v331 = vld [vmem:[#allocation3] sm:$0xff]
  %v332 = vld [vmem:[#allocation3 + $0x8] sm:$0xff]
  %v333 = vld [vmem:[#allocation3 + $0x10] sm:$0x3]
  %v334 = vpack.c.bf16 %v332, %v331
  %v335 = vpack.c.bf16 %v333, %v333
  %v336 = vld [vmem:[%s3] sm:$0xf]
  %v337 = vld [vmem:[%s3 + $0x4] sm:$0xf]
  %v338 = vld [vmem:[%s3 + $0x8] sm:$0xf]
  %v339 = vld [vmem:[%s3 + $0xc] sm:$0xf]
  %v340 = vld [vmem:[%s3 + $0x10] sm:$0xf]
  %v341 = vld [vmem:[%s3 + $0x14] sm:$0xf]
  %v342 = vld [vmem:[%s3 + $0x18] sm:$0xf]
  %v343 = vld [vmem:[%s3 + $0x1c] sm:$0xf]
  %v344 = vld [vmem:[%s3 + $0x20] sm:$0xf]
  %v345 = vld [vmem:[%s3 + $0x24] sm:$0xf]
  %v346 = vld [vmem:[#allocation3 + $0x1] sm:$0xff]
  %v347 = vld [vmem:[#allocation3 + $0x9] sm:$0xff]
  %v348 = vld [vmem:[#allocation3 + $0x11] sm:$0x3]
  %v349 = vpack.c.bf16 %v347, %v346
  %v350 = vpack.c.bf16 %v348, %v348
  %s351 = scalar_lea.vmem %s3, 40
  %v352 = vld [vmem:[%s351] sm:$0xf]
  %v353 = vld [vmem:[%s351 + $0x4] sm:$0xf]
  %v354 = vld [vmem:[%s351 + $0x8] sm:$0xf]
  %v355 = vld [vmem:[%s351 + $0xc] sm:$0xf]
  %v356 = vld [vmem:[%s351 + $0x10] sm:$0xf]
  %v357 = vld [vmem:[%s351 + $0x14] sm:$0xf]
  %v358 = vld [vmem:[%s351 + $0x18] sm:$0xf]
  %v359 = vld [vmem:[%s351 + $0x1c] sm:$0xf]
  %v360 = vld [vmem:[%s351 + $0x20] sm:$0xf]
  %v361 = vld [vmem:[%s351 + $0x24] sm:$0xf]
  %v372 = vunpack.c.l.b16 %v352
  %v373 = vunpack.c.l.b16 %v353
  %v374 = vunpack.c.l.b16 %v354
  %v375 = vunpack.c.l.b16 %v355
  %v376 = vunpack.c.l.b16 %v356
  %v377 = vunpack.c.l.b16 %v357
  %v378 = vunpack.c.l.b16 %v358
  %v379 = vunpack.c.l.b16 %v359
  %v380 = vunpack.c.l.b16 %v360
  %v381 = vunpack.c.l.b16 %v361
  %v382 = vpack.c.b16 %v373, %v372
  %v383 = vpack.c.b16 %v375, %v374
  %v384 = vpack.c.b16 %v377, %v376
  %v385 = vpack.c.b16 %v379, %v378
  %v386 = vpack.c.b16 %v381, %v380
  %v393 = vsel %vm307, %v349, 0
  %v396 = vsel %vm307, %v350, 0
  %398 = vmatprep.subr.bf16.mxu0 0
  %399 = vmatpush1.bf16.msra.mxu0 %v382
  %400 = vmatprep.subr.bf16.mxu0 0
  %401 = vmatpush1.bf16.msra.mxu0 %v383
  %402 = vmatprep.subr.bf16.mxu0 0
  %403 = vmatpush1.bf16.msra.mxu0 %v384
  %404 = vmatprep.subr.bf16.mxu0 0
  %405 = vmatpush1.bf16.msra.mxu0 %v385
  %406 = vmatprep.subr.bf16.mxu0 0
  %407 = vmatpush1.bf16.msra.mxu0 %v386
  %408 = vmatprep.subr.bf16.mxu0 0
  %409 = vmatpush1.bf16.msra.mxu0 0
  %410 = vmatprep.subr.bf16.mxu0 0
  %411 = vmatpush1.bf16.msra.mxu0 0
  %412 = vmatprep.subr.bf16.mxu0 0
  %413 = vmatpush1.bf16.msra.mxu0 0
  %414 = vmatprep.subr.bf16.mxu0 0
  %415 = vmatpush1.bf16.msra.mxu0 0
  %416 = vmatprep.subr.bf16.mxu0 0
  %417 = vmatpush1.bf16.msra.mxu0 0
  %418 = vmatprep.subr.bf16.mxu0 0
  %419 = vmatpush1.bf16.msra.mxu0 0
  %420 = vmatprep.subr.bf16.mxu0 0
  %421 = vmatpush1.bf16.msra.mxu0 0
  %422 = vmatprep.subr.bf16.mxu0 0
  %423 = vmatpush1.bf16.msra.mxu0 0
  %424 = vmatprep.subr.bf16.mxu0 0
  %425 = vmatpush1.bf16.msra.mxu0 0
  %426 = vmatprep.subr.bf16.mxu0 0
  %427 = vmatpush1.bf16.msra.mxu0 0
  %428 = vmatprep.subr.bf16.mxu0 0
  %429 = vmatpush1.bf16.msra.mxu0 0
  %430 = vmatprep.mubr.bf16.mxu0 0
  %431 = vmatmul.mubr.bf16.gmra.mrb[0].mxu0 %v393
  %v432 = vpop.f32.mrb[0].mxu0
  %v433 = vadd.f32 0.0, %v432
  %v434 = vpop.f32.mrb[0].mxu0
  %v435 = vpop.f32.mrb[0].mxu0
  %v436 = vadd.f32 0.0, %v435
  %v437 = vpop.f32.mrb[0].mxu0
  %438 = vmatprep.mubr.bf16.mxu0 0
  %439 = vmatmul.mubr.bf16.gmra.mrb[0].mxu0 %v396
  %v440 = vpop.f32.mrb[0].mxu0
  %v441 = vadd.f32 0.0, %v440
  %v442 = vpop.f32.mrb[0].mxu0
  %v443 = vpop.f32.mrb[0].mxu0
  %v444 = vpop.f32.mrb[0].mxu0
  %445 = vdwg.mxu0
  %v456 = vunpack.c.l.b16 %v336
  %v457 = vunpack.c.l.b16 %v337
  %v458 = vunpack.c.l.b16 %v338
  %v459 = vunpack.c.l.b16 %v339
  %v460 = vunpack.c.l.b16 %v340
  %v461 = vunpack.c.l.b16 %v341
  %v462 = vunpack.c.l.b16 %v342
  %v463 = vunpack.c.l.b16 %v343
  %v464 = vunpack.c.l.b16 %v344
  %v465 = vunpack.c.l.b16 %v345
  %v466 = vpack.c.b16 %v457, %v456
  %v467 = vpack.c.b16 %v459, %v458
  %v468 = vpack.c.b16 %v461, %v460
  %v469 = vpack.c.b16 %v463, %v462
  %v470 = vpack.c.b16 %v465, %v464
  %v477 = vsel %vm307, %v334, 0
  %v480 = vsel %vm307, %v335, 0
  %482 = vmatprep.subr.bf16.mxu0 0
  %483 = vmatpush1.bf16.msra.mxu0 %v466
  %484 = vmatprep.subr.bf16.mxu0 0
  %485 = vmatpush1.bf16.msra.mxu0 %v467
  %486 = vmatprep.subr.bf16.mxu0 0
  %487 = vmatpush1.bf16.msra.mxu0 %v468
  %488 = vmatprep.subr.bf16.mxu0 0
  %489 = vmatpush1.bf16.msra.mxu0 %v469
  %490 = vmatprep.subr.bf16.mxu0 0
  %491 = vmatpush1.bf16.msra.mxu0 %v470
  %492 = vmatprep.subr.bf16.mxu0 0
  %493 = vmatpush1.bf16.msra.mxu0 0
  %494 = vmatprep.subr.bf16.mxu0 0
  %495 = vmatpush1.bf16.msra.mxu0 0
  %496 = vmatprep.subr.bf16.mxu0 0
  %497 = vmatpush1.bf16.msra.mxu0 0
  %498 = vmatprep.subr.bf16.mxu0 0
  %499 = vmatpush1.bf16.msra.mxu0 0
  %500 = vmatprep.subr.bf16.mxu0 0
  %501 = vmatpush1.bf16.msra.mxu0 0
  %502 = vmatprep.subr.bf16.mxu0 0
  %503 = vmatpush1.bf16.msra.mxu0 0
  %504 = vmatprep.subr.bf16.mxu0 0
  %505 = vmatpush1.bf16.msra.mxu0 0
  %506 = vmatprep.subr.bf16.mxu0 0
  %507 = vmatpush1.bf16.msra.mxu0 0
  %508 = vmatprep.subr.bf16.mxu0 0
  %509 = vmatpush1.bf16.msra.mxu0 0
  %510 = vmatprep.subr.bf16.mxu0 0
  %511 = vmatpush1.bf16.msra.mxu0 0
  %512 = vmatprep.subr.bf16.mxu0 0
  %513 = vmatpush1.bf16.msra.mxu0 0
  %514 = vmatprep.mubr.bf16.mxu0 0
  %515 = vmatmul.mubr.bf16.gmra.mrb[0].mxu0 %v477
  %v516 = vpop.f32.mrb[0].mxu0
  %v517 = vadd.f32 %v433, %v516
  %v518 = vpop.f32.mrb[0].mxu0
  %v519 = vpop.f32.mrb[0].mxu0
  %v520 = vadd.f32 %v436, %v519
  %v521 = vpop.f32.mrb[0].mxu0
  %522 = vmatprep.mubr.bf16.mxu0 0
  %523 = vmatmul.mubr.bf16.gmra.mrb[0].mxu0 %v480
  %v524 = vpop.f32.mrb[0].mxu0
  %v525 = vadd.f32 %v441, %v524
  %v526 = vpop.f32.mrb[0].mxu0
  %v527 = vpop.f32.mrb[0].mxu0
  %v528 = vpop.f32.mrb[0].mxu0
  %529 = vdwg.mxu0
  %v530 = vld [vmem:[#allocation3 + $0x2] sm:$0xff]
  %v531 = vld [vmem:[#allocation3 + $0xa] sm:$0xff]
  %v532 = vld [vmem:[#allocation3 + $0x12] sm:$0x3]
  %v533 = vpack.c.bf16 %v531, %v530
  %v534 = vpack.c.bf16 %v532, %v532
  %s535 = scalar_lea.vmem %s3, 80
  %v536 = vld [vmem:[%s535] sm:$0xf]
  %v537 = vld [vmem:[%s535 + $0x4] sm:$0xf]
  %v538 = vld [vmem:[%s535 + $0x8] sm:$0xf]
  %v539 = vld [vmem:[%s535 + $0xc] sm:$0xf]
  %v540 = vld [vmem:[%s535 + $0x10] sm:$0xf]
  %v541 = vld [vmem:[%s535 + $0x14] sm:$0xf]
  %v542 = vld [vmem:[%s535 + $0x18] sm:$0xf]
  %v543 = vld [vmem:[%s535 + $0x1c] sm:$0xf]
  %v544 = vld [vmem:[%s535 + $0x20] sm:$0xf]
  %v545 = vld [vmem:[%s535 + $0x24] sm:$0xf]
  %v556 = vunpack.c.l.b16 %v536
  %v557 = vunpack.c.l.b16 %v537
  %v558 = vunpack.c.l.b16 %v538
  %v559 = vunpack.c.l.b16 %v539
  %v560 = vunpack.c.l.b16 %v540
  %v561 = vunpack.c.l.b16 %v541
  %v562 = vunpack.c.l.b16 %v542
  %v563 = vunpack.c.l.b16 %v543
  %v564 = vunpack.c.l.b16 %v544
  %v565 = vunpack.c.l.b16 %v545
  %v566 = vpack.c.b16 %v557, %v556
  %v567 = vpack.c.b16 %v559, %v558
  %v568 = vpack.c.b16 %v561, %v560
  %v569 = vpack.c.b16 %v563, %v562
  %v570 = vpack.c.b16 %v565, %v564
  %v577 = vsel %vm307, %v533, 0
  %v580 = vsel %vm307, %v534, 0
  %582 = vmatprep.subr.bf16.mxu0 0
  %583 = vmatpush1.bf16.msra.mxu0 %v566
  %584 = vmatprep.subr.bf16.mxu0 0
  %585 = vmatpush1.bf16.msra.mxu0 %v567
  %586 = vmatprep.subr.bf16.mxu0 0
  %587 = vmatpush1.bf16.msra.mxu0 %v568
  %588 = vmatprep.subr.bf16.mxu0 0
  %589 = vmatpush1.bf16.msra.mxu0 %v569
  %590 = vmatprep.subr.bf16.mxu0 0
  %591 = vmatpush1.bf16.msra.mxu0 %v570
  %592 = vmatprep.subr.bf16.mxu0 0
  %593 = vmatpush1.bf16.msra.mxu0 0
  %594 = vmatprep.subr.bf16.mxu0 0
  %595 = vmatpush1.bf16.msra.mxu0 0
  %596 = vmatprep.subr.bf16.mxu0 0
  %597 = vmatpush1.bf16.msra.mxu0 0
  %598 = vmatprep.subr.bf16.mxu0 0
  %599 = vmatpush1.bf16.msra.mxu0 0
  %600 = vmatprep.subr.bf16.mxu0 0
  %601 = vmatpush1.bf16.msra.mxu0 0
  %602 = vmatprep.subr.bf16.mxu0 0
  %603 = vmatpush1.bf16.msra.mxu0 0
  %604 = vmatprep.subr.bf16.mxu0 0
  %605 = vmatpush1.bf16.msra.mxu0 0
  %606 = vmatprep.subr.bf16.mxu0 0
  %607 = vmatpush1.bf16.msra.mxu0 0
  %608 = vmatprep.subr.bf16.mxu0 0
  %609 = vmatpush1.bf16.msra.mxu0 0
  %610 = vmatprep.subr.bf16.mxu0 0
  %611 = vmatpush1.bf16.msra.mxu0 0
  %612 = vmatprep.subr.bf16.mxu0 0
  %613 = vmatpush1.bf16.msra.mxu0 0
  %614 = vmatprep.mubr.bf16.mxu0 0
  %615 = vmatmul.mubr.bf16.gmra.mrb[0].mxu0 %v577
  %v616 = vpop.f32.mrb[0].mxu0
  %v617 = vadd.f32 0.0, %v616
  %v618 = vpop.f32.mrb[0].mxu0
  %v619 = vpop.f32.mrb[0].mxu0
  %v620 = vadd.f32 0.0, %v619
  %v621 = vpop.f32.mrb[0].mxu0
  %622 = vmatprep.mubr.bf16.mxu0 0
  %623 = vmatmul.mubr.bf16.gmra.mrb[0].mxu0 %v580
  %v624 = vpop.f32.mrb[0].mxu0
  %v625 = vadd.f32 0.0, %v624
  %v626 = vpop.f32.mrb[0].mxu0
  %v627 = vpop.f32.mrb[0].mxu0
  %v628 = vpop.f32.mrb[0].mxu0
  %629 = vdwg.mxu0
  %v630 = vadd.f32 %v517, %v617
  %v631 = vadd.f32 %v520, %v620
  %v632 = vadd.f32 %v525, %v625
  %v633 = vld [vmem:[%s4] sm:$0x1]
  %v635 = vlaneseq
  %v636 = vshrl.u32 %v635, 7
  %v637 = vsub.s32 0, %v636
  %v638 = vrot.slane %v633, %v637
  %v640 = vadd.f32 %v630, %v638
  %v641 = vadd.f32 %v631, %v638
  %v642 = vadd.f32 %v632, %v638
  %v643 = vmax.f32 %v640, 0.0
  %v644 = vmax.f32 %v641, 0.0
  %v645 = vmax.f32 %v642, 0.0
  %vm646 = vcmask 523264
  %647 = vst.msk [vmem:[%s5] sm:$0xff] %vm646, %v643
  %s648 = scalar_lea.vmem %s5, 8
  %vm649 = vcmask 523266
  %650 = vst.msk [vmem:[%s648 - $0x2] sm:$0xfc] %vm649, %v644
  %vm651 = vcmask 517120
  %652 = vst.msk [vmem:[%s648 + $0x6] sm:$0x3] %vm651, %v645
  // Predicated region
  $region22: #{_lambda_.1} parent=0 // pred_check
    _
  $region23: #{_lambda_.1} parent=0 // pred_check_branch
    %654 = sbr.rel (0) target = $region25
  $region24: #{_lambda_.1} parent=0 // pred_region
    _
  $region25: #{_lambda_.1} parent=0 // pred_fallthru
    _
  // Predicated region
  $region26: #{_lambda_.1} parent=0 // pred_check
    _
  $region27: #{_lambda_.1} parent=0 // pred_check_branch
    %656 = sbr.rel (0) target = $region29
  $region28: #{_lambda_.1} parent=0 // pred_region
    _
  $region29: #{_lambda_.1} parent=0 // pred_fallthru
    _

</llo_original>
